<compile_context>
chip_gen: v6e
topology: v6e:2x2x1
jax: 0.10.0
libtpu: 0.0.40
codegen_flags: <defaults>
</compile_context>

<pallas_src>
import functools

import jax
import jax.numpy as jnp
import numpy as np
from jax.experimental import pallas as pl
from jax.experimental.pallas import tpu as pltpu


def _conv_bn_relu_kernel(x_ref, w_ref, b_ref, m_ref, o_ref, col_ref, *,
                         KH, KW, H, W, pad):
    # x_ref:   (1, 1, Cin_g, H*W)  one image, one group, spatial on lanes
    # w_ref:   (1, Cout_g, K)      K = KH*KW*Cin_g, BN scale already folded in
    # b_ref:   (1, Cout_g, 1)      folded BN bias (f32)
    # m_ref:   (KH*KW, H*W)        per-tap 0/1 boundary masks
    # o_ref:   (1, 1, Cout_g, H*W)
    # col_ref: (K, H*W)            VMEM im2col scratch
    cin_g = x_ref.shape[2]
    HW = H * W
    x = x_ref[0, 0]                                        # (Cin_g, HW)

    # im2col: each tap = lane rotation (XLU) + boundary mask (VPU).
    for kh in range(KH):
        for kw in range(KW):
            t = kh * KW + kw
            dh, dw = kh - pad, kw - pad
            s = dh * W + dw                                # flat-index shift
            if s == 0:
                # centre tap: no shift, mask is all-ones
                col_ref[t * cin_g:(t + 1) * cin_g, :] = x
            else:
                shifted = pltpu.roll(x, shift=(-s) % HW, axis=1)
                col_ref[t * cin_g:(t + 1) * cin_g, :] = (
                    shifted * m_ref[t:t + 1, :])

    # One matmul with K = KH*KW*Cin_g; output is lane-dense (Cout_g, H*W).
    acc = jnp.dot(w_ref[0], col_ref[...], preferred_element_type=jnp.float32)
    y = jnp.maximum(acc + b_ref[0], 0.0)                   # folded BN + ReLU
    o_ref[0, 0] = y.astype(o_ref.dtype)


def conv_bn_relu(x_nchw, w_oihw, conv_bias, gamma, beta, run_mean, run_var,
                 *, groups, point=False, eps=1e-5):
    """Pallas ConvBNRelu forward (eval-mode BN). (N,Cin,H,W) -> (N,Cout,H,W)."""
    N, Cin, H, W = x_nchw.shape
    Cout, cin_g, KH, KW = w_oihw.shape
    pad = 0 if point else 1
    cout_g = Cout // groups
    HW = H * W
    K = KH * KW * cin_g
    dtype = x_nchw.dtype                       # keep bf16 inputs in bf16

    # ----- layout plumbing: pure reshapes, no activation transposes -----
    x4 = x_nchw.reshape(N, groups, cin_g, HW)

    # Fold BatchNorm (running stats) + conv bias into per-channel scale/bias.
    scale = gamma.astype(jnp.float32) / jnp.sqrt(run_var.astype(jnp.float32) + eps)
    if conv_bias is None:
        conv_bias = jnp.zeros((Cout,), jnp.float32)
    bias = beta.astype(jnp.float32) + (
        conv_bias.astype(jnp.float32) - run_mean.astype(jnp.float32)) * scale

    # Weight (Cout, Cin_g, KH, KW) -> (G, Cout_g, KH*KW*Cin_g), scale folded in.
    w = w_oihw.astype(jnp.float32) * scale[:, None, None, None]
    w3 = jnp.transpose(w, (0, 2, 3, 1)).reshape(groups, cout_g, K).astype(dtype)
    b3 = bias.reshape(groups, cout_g, 1)

    # Per-tap boundary masks ("same" padding realized as roll + mask in-kernel).
    masks = np.zeros((KH * KW, HW), np.float32)
    for kh in range(KH):
        for kw in range(KW):
            hh = np.arange(H)[:, None] + (kh - pad)
            ww = np.arange(W)[None, :] + (kw - pad)
            valid = (hh >= 0) & (hh < H) & (ww >= 0) & (ww < W)
            masks[kh * KW + kw] = valid.astype(np.float32).reshape(HW)
    m = jnp.asarray(masks, dtype)

    kernel = functools.partial(_conv_bn_relu_kernel,
                               KH=KH, KW=KW, H=H, W=W, pad=pad)

    out4 = pl.pallas_call(
        kernel,
        out_shape=jax.ShapeDtypeStruct((N, groups, cout_g, HW), dtype),
        grid_spec=pltpu.PrefetchScalarGridSpec(
            num_scalar_prefetch=0,
            grid=(N, groups),                  # N*groups parallel pipeline steps
            in_specs=[
                pl.BlockSpec((1, 1, cin_g, HW), lambda n, g: (n, g, 0, 0)),
                pl.BlockSpec((1, cout_g, K), lambda n, g: (g, 0, 0)),
                pl.BlockSpec((1, cout_g, 1), lambda n, g: (g, 0, 0)),
                pl.BlockSpec((KH * KW, HW), lambda n, g: (0, 0)),
            ],
            out_specs=pl.BlockSpec((1, 1, cout_g, HW),
                                   lambda n, g: (n, g, 0, 0)),
            scratch_shapes=[pltpu.VMEM((K, HW), dtype)],
        ),
        compiler_params=pltpu.CompilerParams(
            dimension_semantics=("parallel", "parallel")),
    )(x4, w3, b3, m)

    return out4.reshape(N, Cout, H, W)


def _reference(x_nchw, w_oihw, conv_bias, gamma, beta, run_mean, run_var,
               *, groups, point=False, eps=1e-5):
    pad = 0 if point else 1
    x = jnp.transpose(x_nchw, (0, 2, 3, 1))
    w = jnp.transpose(w_oihw, (2, 3, 1, 0))                       # HWIO (grouped)
    y = jax.lax.conv_general_dilated(
        x, w, window_strides=(1, 1), padding=[(pad, pad), (pad, pad)],
        dimension_numbers=("NHWC", "HWIO", "NHWC"),
        feature_group_count=groups)
    if conv_bias is not None:
        y = y + conv_bias
    y = (y - run_mean) / jnp.sqrt(run_var + eps) * gamma + beta
    y = jnp.maximum(y, 0.0)
    return jnp.transpose(y, (0, 3, 1, 2))


if __name__ == "__main__":
    key = jax.random.PRNGKey(0)
    k_x, k_w, k_b, k_g, k_be, k_m, k_v, k_wp = jax.random.split(key, 8)

    # ConvBNRelu(in_channels=4, out_channels=8, groups=2, point=False)
    N, Cin, H, W = 2, 4, 16, 16
    Cout, groups = 8, 2
    KH = KW = 3

    x = jax.random.normal(k_x, (N, Cin, H, W), jnp.float32)
    w = jax.random.normal(k_w, (Cout, Cin // groups, KH, KW), jnp.float32) * 0.2
    conv_bias = jax.random.normal(k_b, (Cout,), jnp.float32) * 0.1
    gamma = 1.0 + 0.1 * jax.random.normal(k_g, (Cout,), jnp.float32)
    beta = 0.1 * jax.random.normal(k_be, (Cout,), jnp.float32)
    run_mean = 0.1 * jax.random.normal(k_m, (Cout,), jnp.float32)
    run_var = jnp.abs(jax.random.normal(k_v, (Cout,), jnp.float32)) + 0.5

    out = conv_bn_relu(x, w, conv_bias, gamma, beta, run_mean, run_var,
                       groups=groups, point=False)
    out = jax.block_until_ready(out)
    ref = _reference(x, w, conv_bias, gamma, beta, run_mean, run_var,
                     groups=groups, point=False)
    np.testing.assert_allclose(np.asarray(out), np.asarray(ref),
                               rtol=1e-3, atol=1e-3)

    # ConvBNRelu(..., point=True): 1x1 grouped conv, no padding.
    wp = jax.random.normal(k_wp, (Cout, Cin // groups, 1, 1), jnp.float32) * 0.2
    out_p = conv_bn_relu(x, wp, conv_bias, gamma, beta, run_mean, run_var,
                         groups=groups, point=True)
    out_p = jax.block_until_ready(out_p)
    ref_p = _reference(x, wp, conv_bias, gamma, beta, run_mean, run_var,
                       groups=groups, point=True)
    np.testing.assert_allclose(np.asarray(out_p), np.asarray(ref_p),
                               rtol=1e-3, atol=1e-3)

    print("KERNEL_OK")
</pallas_src>

<mosaic_0001>
module attributes {stable_mosaic.version = 11 : i64} {
  func.func @_conv_bn_relu_kernel(%arg0: i32, %arg1: i32, %arg2: memref<1x1x2x256xf32, #tpu.memory_space<vmem>>, %arg3: memref<1x4x18xf32, #tpu.memory_space<vmem>>, %arg4: memref<1x4x1xf32, #tpu.memory_space<vmem>>, %arg5: memref<9x256xf32, #tpu.memory_space<vmem>>, %arg6: memref<1x1x4x256xf32, #tpu.memory_space<vmem>>, %arg7: memref<18x256xf32, #tpu.memory_space<vmem>>) attributes {dimension_semantics = [#tpu.dimension_semantics<parallel>, #tpu.dimension_semantics<parallel>], iteration_bounds = array<i64: 2, 2>, scalar_prefetch = 0 : i64, scratch_operands = 1 : i64, tpu.core_type = #tpu.core_type<tc>, window_params = [{transform_indices = @transform_0, window_bounds = array<i64: 1, 1, 2, 256>}, {transform_indices = @transform_1, window_bounds = array<i64: 1, 4, 18>}, {transform_indices = @transform_2, window_bounds = array<i64: 1, 4, 1>}, {pipeline_mode = #tpu.pipeline_mode<synchronous>, transform_indices = @transform_3, window_bounds = array<i64: 9, 256>}, {transform_indices = @transform_4, window_bounds = array<i64: 1, 1, 4, 256>}]} {
    %c0 = arith.constant 0 : index
    %c0_0 = arith.constant 0 : index
    %c0_1 = arith.constant 0 : index
    %c0_2 = arith.constant 0 : index
    %0 = vector.load %arg2[%c0, %c0_0, %c0_1, %c0_2] : memref<1x1x2x256xf32, #tpu.memory_space<vmem>>, vector<1x1x2x256xf32>
    %1 = vector.shape_cast %0 : vector<1x1x2x256xf32> to vector<2x256xf32>
    %c17_i32 = arith.constant 17 : i32
    %2 = tpu.dynamic_rotate %1 by %c17_i32 dim 1 : vector<2x256xf32>, i32 -> vector<2x256xf32>
    %c0_3 = arith.constant 0 : index
    %c0_4 = arith.constant 0 : index
    %3 = vector.load %arg5[%c0_3, %c0_4] : memref<9x256xf32, #tpu.memory_space<vmem>>, vector<1x256xf32>
    %4 = vector.broadcast %3 : vector<1x256xf32> to vector<2x256xf32>
    %5 = arith.mulf %2, %4 : vector<2x256xf32>
    %c0_5 = arith.constant 0 : index
    %c0_6 = arith.constant 0 : index
    %6 = vector.load %arg7[%c0_5, %c0_6] : memref<18x256xf32, #tpu.memory_space<vmem>>, vector<2x256xf32>
    tpu.vector_store %arg7[%c0_5, %c0_6], %5 {strides = array<i32>} : memref<18x256xf32, #tpu.memory_space<vmem>>, vector<2x256xf32>,
    %c16_i32 = arith.constant 16 : i32
    %7 = tpu.dynamic_rotate %1 by %c16_i32 dim 1 : vector<2x256xf32>, i32 -> vector<2x256xf32>
    %c1 = arith.constant 1 : index
    %c0_7 = arith.constant 0 : index
    %8 = vector.load %arg5[%c1, %c0_7] : memref<9x256xf32, #tpu.memory_space<vmem>>, vector<1x256xf32>
    %9 = vector.broadcast %8 : vector<1x256xf32> to vector<2x256xf32>
    %10 = arith.mulf %7, %9 : vector<2x256xf32>
    %c2 = arith.constant 2 : index
    %c0_8 = arith.constant 0 : index
    %11 = vector.load %arg7[%c2, %c0_8] : memref<18x256xf32, #tpu.memory_space<vmem>>, vector<2x256xf32>
    tpu.vector_store %arg7[%c2, %c0_8], %10 {strides = array<i32>} : memref<18x256xf32, #tpu.memory_space<vmem>>, vector<2x256xf32>,
    %c15_i32 = arith.constant 15 : i32
    %12 = tpu.dynamic_rotate %1 by %c15_i32 dim 1 : vector<2x256xf32>, i32 -> vector<2x256xf32>
    %c2_9 = arith.constant 2 : index
    %c0_10 = arith.constant 0 : index
    %13 = vector.load %arg5[%c2_9, %c0_10] : memref<9x256xf32, #tpu.memory_space<vmem>>, vector<1x256xf32>
    %14 = vector.broadcast %13 : vector<1x256xf32> to vector<2x256xf32>
    %15 = arith.mulf %12, %14 : vector<2x256xf32>
    %c4 = arith.constant 4 : index
    %c0_11 = arith.constant 0 : index
    %16 = vector.load %arg7[%c4, %c0_11] : memref<18x256xf32, #tpu.memory_space<vmem>>, vector<2x256xf32>
    tpu.vector_store %arg7[%c4, %c0_11], %15 {strides = array<i32>} : memref<18x256xf32, #tpu.memory_space<vmem>>, vector<2x256xf32>,
    %c1_i32 = arith.constant 1 : i32
    %17 = tpu.dynamic_rotate %1 by %c1_i32 dim 1 : vector<2x256xf32>, i32 -> vector<2x256xf32>
    %c3 = arith.constant 3 : index
    %c0_12 = arith.constant 0 : index
    %18 = vector.load %arg5[%c3, %c0_12] : memref<9x256xf32, #tpu.memory_space<vmem>>, vector<1x256xf32>
    %19 = vector.broadcast %18 : vector<1x256xf32> to vector<2x256xf32>
    %20 = arith.mulf %17, %19 : vector<2x256xf32>
    %c6 = arith.constant 6 : index
    %c0_13 = arith.constant 0 : index
    %21 = vector.load %arg7[%c6, %c0_13] : memref<18x256xf32, #tpu.memory_space<vmem>>, vector<2x256xf32>
    tpu.vector_store %arg7[%c6, %c0_13], %20 {strides = array<i32>} : memref<18x256xf32, #tpu.memory_space<vmem>>, vector<2x256xf32>,
    %c8 = arith.constant 8 : index
    %c0_14 = arith.constant 0 : index
    %22 = vector.load %arg7[%c8, %c0_14] : memref<18x256xf32, #tpu.memory_space<vmem>>, vector<2x256xf32>
    tpu.vector_store %arg7[%c8, %c0_14], %1 {strides = array<i32>} : memref<18x256xf32, #tpu.memory_space<vmem>>, vector<2x256xf32>,
    %c255_i32 = arith.constant 255 : i32
    %23 = tpu.dynamic_rotate %1 by %c255_i32 dim 1 : vector<2x256xf32>, i32 -> vector<2x256xf32>
    %c5 = arith.constant 5 : index
    %c0_15 = arith.constant 0 : index
    %24 = vector.load %arg5[%c5, %c0_15] : memref<9x256xf32, #tpu.memory_space<vmem>>, vector<1x256xf32>
    %25 = vector.broadcast %24 : vector<1x256xf32> to vector<2x256xf32>
    %26 = arith.mulf %23, %25 : vector<2x256xf32>
    %c10 = arith.constant 10 : index
    %c0_16 = arith.constant 0 : index
    %27 = vector.load %arg7[%c10, %c0_16] : memref<18x256xf32, #tpu.memory_space<vmem>>, vector<2x256xf32>
    tpu.vector_store %arg7[%c10, %c0_16], %26 {strides = array<i32>} : memref<18x256xf32, #tpu.memory_space<vmem>>, vector<2x256xf32>,
    %c241_i32 = arith.constant 241 : i32
    %28 = tpu.dynamic_rotate %1 by %c241_i32 dim 1 : vector<2x256xf32>, i32 -> vector<2x256xf32>
    %c6_17 = arith.constant 6 : index
    %c0_18 = arith.constant 0 : index
    %29 = vector.load %arg5[%c6_17, %c0_18] : memref<9x256xf32, #tpu.memory_space<vmem>>, vector<1x256xf32>
    %30 = vector.broadcast %29 : vector<1x256xf32> to vector<2x256xf32>
    %31 = arith.mulf %28, %30 : vector<2x256xf32>
    %c12 = arith.constant 12 : index
    %c0_19 = arith.constant 0 : index
    %32 = vector.load %arg7[%c12, %c0_19] : memref<18x256xf32, #tpu.memory_space<vmem>>, vector<2x256xf32>
    tpu.vector_store %arg7[%c12, %c0_19], %31 {strides = array<i32>} : memref<18x256xf32, #tpu.memory_space<vmem>>, vector<2x256xf32>,
    %c240_i32 = arith.constant 240 : i32
    %33 = tpu.dynamic_rotate %1 by %c240_i32 dim 1 : vector<2x256xf32>, i32 -> vector<2x256xf32>
    %c7 = arith.constant 7 : index
    %c0_20 = arith.constant 0 : index
    %34 = vector.load %arg5[%c7, %c0_20] : memref<9x256xf32, #tpu.memory_space<vmem>>, vector<1x256xf32>
    %35 = vector.broadcast %34 : vector<1x256xf32> to vector<2x256xf32>
    %36 = arith.mulf %33, %35 : vector<2x256xf32>
    %c14 = arith.constant 14 : index
    %c0_21 = arith.constant 0 : index
    %37 = vector.load %arg7[%c14, %c0_21] : memref<18x256xf32, #tpu.memory_space<vmem>>, vector<2x256xf32>
    tpu.vector_store %arg7[%c14, %c0_21], %36 {strides = array<i32>} : memref<18x256xf32, #tpu.memory_space<vmem>>, vector<2x256xf32>,
    %c239_i32 = arith.constant 239 : i32
    %38 = tpu.dynamic_rotate %1 by %c239_i32 dim 1 : vector<2x256xf32>, i32 -> vector<2x256xf32>
    %c8_22 = arith.constant 8 : index
    %c0_23 = arith.constant 0 : index
    %39 = vector.load %arg5[%c8_22, %c0_23] : memref<9x256xf32, #tpu.memory_space<vmem>>, vector<1x256xf32>
    %40 = vector.broadcast %39 : vector<1x256xf32> to vector<2x256xf32>
    %41 = arith.mulf %38, %40 : vector<2x256xf32>
    %c16 = arith.constant 16 : index
    %c0_24 = arith.constant 0 : index
    %42 = vector.load %arg7[%c16, %c0_24] : memref<18x256xf32, #tpu.memory_space<vmem>>, vector<2x256xf32>
    tpu.vector_store %arg7[%c16, %c0_24], %41 {strides = array<i32>} : memref<18x256xf32, #tpu.memory_space<vmem>>, vector<2x256xf32>,
    %c0_25 = arith.constant 0 : index
    %c0_26 = arith.constant 0 : index
    %c0_27 = arith.constant 0 : index
    %43 = vector.load %arg3[%c0_25, %c0_26, %c0_27] : memref<1x4x18xf32, #tpu.memory_space<vmem>>, vector<1x4x18xf32>
    %44 = vector.shape_cast %43 : vector<1x4x18xf32> to vector<4x18xf32>
    %c0_28 = arith.constant 0 : index
    %c0_29 = arith.constant 0 : index
    %45 = vector.load %arg7[%c0_28, %c0_29] : memref<18x256xf32, #tpu.memory_space<vmem>>, vector<18x256xf32>
    %cst = arith.constant dense<0.000000e+00> : vector<4x256xf32>
    %46 = tpu.matmul %44, %45, %cst {dimension_numbers = #tpu.dot_dimension_numbers<[1], [0], [0], [1], [0, 0, 1, 1], [], []>} : vector<4x18xf32>, vector<18x256xf32>, vector<4x256xf32> -> vector<4x256xf32>
    %c0_30 = arith.constant 0 : index
    %c0_31 = arith.constant 0 : index
    %c0_32 = arith.constant 0 : index
    %47 = vector.load %arg4[%c0_30, %c0_31, %c0_32] : memref<1x4x1xf32, #tpu.memory_space<vmem>>, vector<1x4x1xf32>
    %48 = vector.shape_cast %47 : vector<1x4x1xf32> to vector<4x1xf32>
    %49 = vector.broadcast %48 : vector<4x1xf32> to vector<4x256xf32>
    %50 = arith.addf %46, %49 : vector<4x256xf32>
    %cst_33 = arith.constant 0.000000e+00 : f32
    %51 = vector.broadcast %cst_33 : f32 to vector<4x256xf32>
    %52 = arith.maximumf %50, %51 : vector<4x256xf32>
    %c0_34 = arith.constant 0 : index
    %c0_35 = arith.constant 0 : index
    %c0_36 = arith.constant 0 : index
    %c0_37 = arith.constant 0 : index
    %53 = vector.load %arg6[%c0_34, %c0_35, %c0_36, %c0_37] : memref<1x1x4x256xf32, #tpu.memory_space<vmem>>, vector<1x1x4x256xf32>
    %54 = vector.shape_cast %53 : vector<1x1x4x256xf32> to vector<4x256xf32>
    %55 = vector.shape_cast %52 : vector<4x256xf32> to vector<1x1x4x256xf32>
    tpu.vector_store %arg6[%c0_34, %c0_35, %c0_36, %c0_37], %55 {strides = array<i32>} : memref<1x1x4x256xf32, #tpu.memory_space<vmem>>, vector<1x1x4x256xf32>,
    return
  }
  func.func @transform_0(%arg0: i32, %arg1: i32) -> (i32, i32, i32, i32) {
    %c0_i32 = arith.constant 0 : i32
    %c0_i32_0 = arith.constant 0 : i32
    %c0_i32_1 = arith.constant 0 : i32
    return %arg0, %arg1, %c0_i32, %c0_i32_0 : i32, i32, i32, i32
  }
  func.func @transform_1(%arg0: i32, %arg1: i32) -> (i32, i32, i32) {
    %c0_i32 = arith.constant 0 : i32
    %c0_i32_0 = arith.constant 0 : i32
    %c0_i32_1 = arith.constant 0 : i32
    return %arg1, %c0_i32, %c0_i32_0 : i32, i32, i32
  }
  func.func @transform_2(%arg0: i32, %arg1: i32) -> (i32, i32, i32) {
    %c0_i32 = arith.constant 0 : i32
    %c0_i32_0 = arith.constant 0 : i32
    %c0_i32_1 = arith.constant 0 : i32
    return %arg1, %c0_i32, %c0_i32_0 : i32, i32, i32
  }
  func.func @transform_3(%arg0: i32, %arg1: i32) -> (i32, i32) {
    %c0_i32 = arith.constant 0 : i32
    %c0_i32_0 = arith.constant 0 : i32
    %c0_i32_1 = arith.constant 0 : i32
    return %c0_i32, %c0_i32_0 : i32, i32
  }
  func.func @transform_4(%arg0: i32, %arg1: i32) -> (i32, i32, i32, i32) {
    %c0_i32 = arith.constant 0 : i32
    %c0_i32_0 = arith.constant 0 : i32
    %c0_i32_1 = arith.constant 0 : i32
    return %arg0, %arg1, %c0_i32, %c0_i32_0 : i32, i32, i32, i32
  }
}

</mosaic_0001>

<llo_original>
// kernel: tpu_custom_call.1
$region0: #{tpu_custom_call.1}
  #allocation0 [shape = 'u32[]', space=smem, size = 0x4, offset = 0x4, fixed_abs, tag = 'smem constant byte address 0x4 - core index']
  #allocation1 [shape = 'u32[144,128]{1,0:T(1,128)}', space=vmem, size = 0x12000, scoped, tag = 'internal scratch']
  #allocation2 [shape = 'f32[18,256]{1,0:T(8,128)}', space=vmem, size = 0x6000, scoped, tag = 'scratch operand']
  %s0 = inlined_call_operand.hbm [shape: f32[2,2,2,256], index: 0, kind: input, shape index: {}]
  %s1 = inlined_call_operand.vmem [shape: f32[2,4,18], index: 1, kind: input, shape index: {}]
  %s2 = inlined_call_operand.vmem [shape: f32[2,4,1], index: 2, kind: input, shape index: {}]
  %s3 = inlined_call_operand.hbm [shape: f32[9,256], index: 3, kind: input, shape index: {}]
  %s4 = inlined_call_operand.hbm [shape: f32[2,2,4,256], index: 4, kind: output, shape index: {}]
  %s5 = sld [smem:[#allocation0]]
  $region57: #{tpu_custom_call.1} parent=0
    _
  %s7 = ssub.s32 1, %s5
  %s8 = scalar_select 0, %s7, %s5
  $region1: #{tpu_custom_call.1} parent=0
    #allocation3 [shape = 'u8[4096]{0}', space=vmem, size = 0x1000, scoped, tag = 'input window, operand 0']
    #allocation4 [shape = 's32[2]{0}', space=sflag, size = 0x8, scoped, tag = 'scoped memory for tpu_custom_call.1']
    #allocation5 [shape = 's32[2]{0}', space=sflag, size = 0x8, scoped, tag = 'scoped memory for tpu_custom_call.1']
    #allocation6 [shape = 'u8[16384]{0}', space=vmem, size = 0x4000, scoped, tag = 'input window, operand 3, single buffered']
    #allocation7 [shape = 's32[1]{0}', space=sflag, size = 0x4, scoped, tag = 'scoped memory for tpu_custom_call.1']
    #allocation8 [shape = 'u8[8192]{0}', space=vmem, size = 0x2000, scoped, tag = 'output window, operand 0']
    %9 = vsyncpa [#allocation4], 0
    %s10 = scalar_lea.sflag [#allocation4], 1
    %11 = vsyncpa %s10, 0
    %12 = vsyncpa [#allocation7], 0
    %13 = vsyncpa [#allocation5], 0
    %s14 = scalar_lea.sflag [#allocation5], 1
    %15 = vsyncpa %s14, 0
    loop: start=0, step=1, limit=6
    $region2: #{tpu_custom_call.1} parent=1 // loop_pre_header
      _
    $region3: #{tpu_custom_call.1} parent=1 // loop_header
      %s17 = sphi 0, %s21
      %p18 = scmp.ge.s32.totalorder %s17, 6
      %s24 = sphi 0, %s36
      %s25 = sphi 0, %s32
      %s26 = sphi 0, %s24
      %s27 = sphi 0, %s25
      %s28 = sphi 0, %s26
      %s29 = sphi 0, %s27
      %s41 = sphi 0, %s43
      %s44 = sphi 0, %s41
      %s45 = sphi 0, %s44
      %s61 = sphi 0, %s45
      %s67 = sphi 0, %s69
      %s70 = sphi 0, %s67
      %s71 = sphi 0, %s70
      %s87 = sphi 0, %s71
      %s93 = sphi 0, %s95
      %s96 = sphi 0, %s93
      %s97 = sphi 0, %s96
      %s113 = sphi 0, %s97
      %s117 = sphi 0, %s117
      %s119 = sphi 0, %s117
      %s120 = sphi 0, %s119
      %s134 = sphi 0, %s120
      %s142 = sphi 0, %s144
      %s145 = sphi 0, %s142
      %s146 = sphi 0, %s145
      %s162 = sphi 0, %s146
    $region4: #{tpu_custom_call.1} parent=1 // loop_header_branch
      %20 = sbr.rel (%p18) target = $region8
    $region5: #{tpu_custom_call.1} parent=1 // loop_body
      %s22 = ssub.s32 %s17, 1
      %s23 = ssub.s32 %s17, 2
      %s30 = sadd.s32 1, %s25
      %p31 = scmp.ge.s32.totalorder %s30, 2
      %s32 = scalar_select %p31, 0, %s30
      %s33 = sadd.s32 1, %s24
      %s34 = scalar_select %p31, %s33, %s24
      %p35 = scmp.ge.s32.totalorder %s34, 2
      %s36 = scalar_select %p35, 0, %s34
      %s37 = ssub.s32 %s24, %s36
      %s38 = ssub.s32 %s25, %s32
      %s39 = sor.u32 %s37, %s38
      %p40 = scmp.eq.s32.totalorder %s39, 0
      %s42 = sadd.s32 %s41, 1
      %s43 = scalar_select %p40, %s41, %s42
      %p46 = pneg %p40
      %p47 = scmp.eq.s32.totalorder %s17, 3
      %p48 = por %p46, %p47
      %p49 = scmp.ne.s32.totalorder %s41, %s44
      %p50 = scmp.eq.s32.totalorder %s17, 0
      %p51 = por %p49, %p50
      %p52 = scmp.ne.s32.totalorder %s41, %s44
      %p53 = scmp.eq.s32.totalorder %s22, 3
      %p54 = por %p52, %p53
      %p55 = scmp.ne.s32.totalorder %s44, %s45
      %p56 = scmp.eq.s32.totalorder %s22, 0
      %p57 = por %p55, %p56
      %p58 = scmp.ne.s32.totalorder %s44, %s45
      %p59 = scmp.eq.s32.totalorder %s23, 3
      %p60 = por %p58, %p59
      %p62 = scmp.ne.s32.totalorder %s45, %s61
      %p63 = scmp.eq.s32.totalorder %s23, 0
      %p64 = por %p62, %p63
      %s65 = ssub.s32 %s25, %s32
      %p66 = scmp.eq.s32.totalorder %s65, 0
      %s68 = sadd.s32 %s67, 1
      %s69 = scalar_select %p66, %s67, %s68
      %p72 = pneg %p66
      %p73 = scmp.eq.s32.totalorder %s17, 3
      %p74 = por %p72, %p73
      %p75 = scmp.ne.s32.totalorder %s67, %s70
      %p76 = scmp.eq.s32.totalorder %s17, 0
      %p77 = por %p75, %p76
      %p78 = scmp.ne.s32.totalorder %s67, %s70
      %p79 = scmp.eq.s32.totalorder %s22, 3
      %p80 = por %p78, %p79
      %p81 = scmp.ne.s32.totalorder %s70, %s71
      %p82 = scmp.eq.s32.totalorder %s22, 0
      %p83 = por %p81, %p82
      %p84 = scmp.ne.s32.totalorder %s70, %s71
      %p85 = scmp.eq.s32.totalorder %s23, 3
      %p86 = por %p84, %p85
      %p88 = scmp.ne.s32.totalorder %s71, %s87
      %p89 = scmp.eq.s32.totalorder %s23, 0
      %p90 = por %p88, %p89
      %s91 = ssub.s32 %s25, %s32
      %p92 = scmp.eq.s32.totalorder %s91, 0
      %s94 = sadd.s32 %s93, 1
      %s95 = scalar_select %p92, %s93, %s94
      %p98 = pneg %p92
      %p99 = scmp.eq.s32.totalorder %s17, 3
      %p100 = por %p98, %p99
      %p101 = scmp.ne.s32.totalorder %s93, %s96
      %p102 = scmp.eq.s32.totalorder %s17, 0
      %p103 = por %p101, %p102
      %p104 = scmp.ne.s32.totalorder %s93, %s96
      %p105 = scmp.eq.s32.totalorder %s22, 3
      %p106 = por %p104, %p105
      %p107 = scmp.ne.s32.totalorder %s96, %s97
      %p108 = scmp.eq.s32.totalorder %s22, 0
      %p109 = por %p107, %p108
      %p110 = scmp.ne.s32.totalorder %s96, %s97
      %p111 = scmp.eq.s32.totalorder %s23, 3
      %p112 = por %p110, %p111
      %p114 = scmp.ne.s32.totalorder %s97, %s113
      %p115 = scmp.eq.s32.totalorder %s23, 0
      %p116 = por %p114, %p115
      %s118 = sadd.s32 %s117, 1
      %p121 = scmp.eq.s32.totalorder %s17, 3
      %p122 = scmp.ne.s32.totalorder %s117, %s119
      %p123 = scmp.eq.s32.totalorder %s17, 0
      %p124 = por %p122, %p123
      %p125 = scmp.ne.s32.totalorder %s117, %s119
      %p126 = scmp.eq.s32.totalorder %s22, 3
      %p127 = por %p125, %p126
      %p128 = scmp.ne.s32.totalorder %s119, %s120
      %p129 = scmp.eq.s32.totalorder %s22, 0
      %p130 = por %p128, %p129
      %p131 = scmp.ne.s32.totalorder %s119, %s120
      %p132 = scmp.eq.s32.totalorder %s23, 3
      %p133 = por %p131, %p132
      %p135 = scmp.ne.s32.totalorder %s120, %s134
      %p136 = scmp.eq.s32.totalorder %s23, 0
      %p137 = por %p135, %p136
      %s138 = ssub.s32 %s24, %s36
      %s139 = ssub.s32 %s25, %s32
      %s140 = sor.u32 %s138, %s139
      %p141 = scmp.eq.s32.totalorder %s140, 0
      %s143 = sadd.s32 %s142, 1
      %s144 = scalar_select %p141, %s142, %s143
      %p147 = pneg %p141
      %p148 = scmp.eq.s32.totalorder %s17, 3
      %p149 = por %p147, %p148
      %p150 = scmp.ne.s32.totalorder %s142, %s145
      %p151 = scmp.eq.s32.totalorder %s17, 0
      %p152 = por %p150, %p151
      %p153 = scmp.ne.s32.totalorder %s142, %s145
      %p154 = scmp.eq.s32.totalorder %s22, 3
      %p155 = por %p153, %p154
      %p156 = scmp.ne.s32.totalorder %s145, %s146
      %p157 = scmp.eq.s32.totalorder %s22, 0
      %p158 = por %p156, %p157
      %p159 = scmp.ne.s32.totalorder %s145, %s146
      %p160 = scmp.eq.s32.totalorder %s23, 3
      %p161 = por %p159, %p160
      %p163 = scmp.ne.s32.totalorder %s146, %s162
      %p164 = scmp.eq.s32.totalorder %s23, 0
      %p165 = por %p163, %p164
      %p166 = scmp.le.s32.totalorder 1, %s17
      %p167 = scmp.lt.s32.totalorder %s17, 5
      %p168 = pnand %p166, %p167
      %p169 = pneg %p168
      // Predicated region
      $region9: #{tpu_custom_call.1} parent=5 // pred_check
        _
      $region10: #{tpu_custom_call.1} parent=5 // pred_check_branch
        %171 = sbr.rel (%p168) target = $region12
      $region11: #{tpu_custom_call.1} parent=5 // pred_region
        %s172 = ssub.s32 %s17, 1
        // Predicated region
        $region13: #{tpu_custom_call.1} parent=11 // pred_check
          %p173 = pneg %p130
        $region14: #{tpu_custom_call.1} parent=11 // pred_check_branch
          %175 = sbr.rel (%p173) target = $region16
        $region15: #{tpu_custom_call.1} parent=11 // pred_region
          %s177 = ssub.s32 512, 512
          %178 = vsyncadd [#allocation7], %s177
          %s179 = sshll.u32 [#allocation6], 4
          %s180 = int_to_ptr.vmem [resolvable:$true] %s179
          %185 = dma.hbm_to_vmem [thread:$0]  %s3, 512, %s180, [#allocation7], 256, 256, 16
        $region16: #{tpu_custom_call.1} parent=11 // pred_fallthru
          _
      $region12: #{tpu_custom_call.1} parent=5 // pred_fallthru
        _
      %p186 = scmp.lt.s32.totalorder %s17, 4
      // Predicated region
      $region17: #{tpu_custom_call.1} parent=5 // pred_check
        %p187 = pneg %p186
      $region18: #{tpu_custom_call.1} parent=5 // pred_check_branch
        %189 = sbr.rel (%p187) target = $region20
      $region19: #{tpu_custom_call.1} parent=5 // pred_region
        // Predicated region
        $region21: #{tpu_custom_call.1} parent=19 // pred_check
          %p190 = pneg %p51
        $region22: #{tpu_custom_call.1} parent=19 // pred_check_branch
          %192 = sbr.rel (%p190) target = $region24
        $region23: #{tpu_custom_call.1} parent=19 // pred_region
          %s193 = sand.u32 %s41, 1
          %s194 = scalar_lea.sflag [#allocation4], %s193
          %s195 = sand.u32 %s41, 1
          %s196 = smul.addr %s195, 4
          %s197 = scalar_lea.vmem [#allocation3], %s196
          %s199 = ssub.s32 64, 64
          %200 = vsyncadd %s194, %s199
          %s201 = smul.addr %s25, 2
          %s202 = smul.addr %s24, 4
          %s203 = sadd.s32 %s201, %s202
          %s204 = smul.addr %s203, 32
          %s205 = scalar_lea.hbm %s0, %s204
          %s207 = sshll.u32 %s197, 4
          %s208 = int_to_ptr.vmem [resolvable:$true] %s207
          %210 = dma.hbm_to_vmem [thread:$0]  %s205, 64, %s208, %s194
        $region24: #{tpu_custom_call.1} parent=19 // pred_fallthru
          _
        // Predicated region
        $region25: #{tpu_custom_call.1} parent=19 // pred_check
          %p211 = pneg %p77
        $region26: #{tpu_custom_call.1} parent=19 // pred_check_branch
          %213 = sbr.rel (%p211) target = $region28
        $region27: #{tpu_custom_call.1} parent=19 // pred_region
          %p214 = scmp.lt.s32.totalorder %s25, 1
          %s215 = scalar_select %p214, %s25, 1
          %s216 = smul.addr %s215, 4
          %s217 = scalar_lea.vmem %s1, %s216
        $region28: #{tpu_custom_call.1} parent=19 // pred_fallthru
          _
        // Predicated region
        $region29: #{tpu_custom_call.1} parent=19 // pred_check
          %p218 = pneg %p103
        $region30: #{tpu_custom_call.1} parent=19 // pred_check_branch
          %220 = sbr.rel (%p218) target = $region32
        $region31: #{tpu_custom_call.1} parent=19 // pred_region
          %p221 = scmp.lt.s32.totalorder %s25, 1
          %s222 = scalar_select %p221, %s25, 1
          %s223 = smul.addr %s222, 4
          %s224 = scalar_lea.vmem %s2, %s223
        $region32: #{tpu_custom_call.1} parent=19 // pred_fallthru
          _
      $region20: #{tpu_custom_call.1} parent=5 // pred_fallthru
        _
      %p225 = scmp.le.s32.totalorder 1, %s17
      %p226 = scmp.lt.s32.totalorder %s17, 5
      %p227 = pnand %p225, %p226
      %p228 = pneg %p227
      // Predicated region
      $region33: #{tpu_custom_call.1} parent=5 // pred_check
        _
      $region34: #{tpu_custom_call.1} parent=5 // pred_check_branch
        %230 = sbr.rel (%p227) target = $region36
      $region35: #{tpu_custom_call.1} parent=5 // pred_region
        %s231 = ssub.s32 %s17, 1
        %s232 = sand.u32 %s44, 1
        %s233 = scalar_lea.sflag [#allocation4], %s232
        %s234 = sand.u32 %s44, 1
        %s235 = smul.addr %s234, 4
        %s236 = scalar_lea.vmem [#allocation3], %s235
        // Predicated region
        $region37: #{tpu_custom_call.1} parent=35 // pred_check
          %p237 = pneg %p57
        $region38: #{tpu_custom_call.1} parent=35 // pred_check_branch
          %239 = sbr.rel (%p237) target = $region40
        $region39: #{tpu_custom_call.1} parent=35 // pred_region
          %240 = dma.done %s233, 64
        $region40: #{tpu_custom_call.1} parent=35 // pred_fallthru
          _
        // Predicated region
        $region41: #{tpu_custom_call.1} parent=35 // pred_check
          %p241 = pneg %p130
        $region42: #{tpu_custom_call.1} parent=35 // pred_check_branch
          %243 = sbr.rel (%p241) target = $region44
        $region43: #{tpu_custom_call.1} parent=35 // pred_region
          %244 = dma.done [#allocation7], 512
        $region44: #{tpu_custom_call.1} parent=35 // pred_fallthru
          _
        %s245 = sand.u32 %s44, 1
        %s246 = scalar_lea.sflag [#allocation4], %s245
        %s247 = sand.u32 %s44, 1
        %s248 = smul.addr %s247, 4
        %s249 = scalar_lea.vmem [#allocation3], %s248
        %p250 = pneg %p57
        %p251 = pneg %p54
        %p252 = scmp.lt.s32.totalorder %s27, 1
        %s253 = scalar_select %p252, %s27, 1
        %s254 = smul.addr %s253, 4
        %s255 = scalar_lea.vmem %s1, %s254
        %p256 = pneg %p83
        %p257 = pneg %p80
        %p258 = scmp.lt.s32.totalorder %s27, 1
        %s259 = scalar_select %p258, %s27, 1
        %s260 = smul.addr %s259, 4
        %s261 = scalar_lea.vmem %s2, %s260
        %p262 = pneg %p109
        %p263 = pneg %p106
        %p264 = pneg %p130
        %p265 = pneg %p127
        %p266 = pneg %p158
        %p267 = pneg %p155
        %s268 = sand.u32 %s145, 1
        %s269 = scalar_lea.sflag [#allocation5], %s268
        %s270 = sand.u32 %s145, 1
        %s271 = smul.addr %s270, 8
        %s272 = scalar_lea.vmem [#allocation8], %s271
        %p273 = scmp.lt.s32.totalorder %s27, 1
        %s274 = scalar_select %p273, %s27, 1
        %s275 = smul.addr %s274, 4
        %s276 = scalar_lea.vmem %s1, %s275
        %p277 = scmp.lt.s32.totalorder %s27, 1
        %s278 = scalar_select %p277, %s27, 1
        %s279 = smul.addr %s278, 4
        %s280 = scalar_lea.vmem %s2, %s279
        %v281 = vld [vmem:[%s236] sm:$0xf]
        %v284 = vunpack.c.l.s4 1983009808
        %v285 = vunpack.c.0.s8 %v284
        %v286 = vlaneseq
        %v287 = vshrl.u32 %v286, 7
        %v288 = vsub.s32 %v285, %v287
        %v289 = vrot.slane %v281, %v288
        %v290 = vcombine.high %v289, %v289
        %293 = vrot.lane.b32.xlu0 %v289, 17
        %v294 = vpop.permute.xlu0 %293
        %295 = vrot.lane.b32.xlu0 %v290, 17
        %v296 = vpop.permute.xlu0 %295
        %v297 = vlaneseq
        %v298 = vand.u32 %v297, 127
        %vm299 = vcmp.lt.s32.totalorder %v298, 17
        %v300 = vsel %vm299, %v294, %v296
        %v301 = vsel %vm299, %v296, %v294
        %v302 = vld [vmem:[#allocation6] ss:$8 sm:$0x3]
        %v304 = vlaneseq
        %v305 = vshrl.u32 %v304, 7
        %v306 = vsub.s32 0, %v305
        %v307 = vrot.slane %v302, %v306
        %v308 = vlaneseq
        %v309 = vshrl.u32 %v308, 7
        %v310 = vsub.s32 1, %v309
        %v311 = vrot.slane %v302, %v310
        %v314 = vmul.f32 %v301, %v307
        %v315 = vmul.f32 %v300, %v311
        %316 = vst [vmem:[#allocation2] sm:$0x3] %v314
        %317 = vst [vmem:[#allocation2 + $0x8] sm:$0x3] %v315
        %318 = vrot.lane.b32.xlu0 %v289, 16
        %v319 = vpop.permute.xlu0 %318
        %320 = vrot.lane.b32.xlu0 %v290, 16
        %v321 = vpop.permute.xlu0 %320
        %vm322 = vcmp.lt.s32.totalorder %v298, 16
        %v323 = vsel %vm322, %v319, %v321
        %v324 = vsel %vm322, %v321, %v319
        %s325 = scalar_lea.vmem [#allocation6], 1
        %v326 = vld [vmem:[%s325] ss:$8 sm:$0x3]
        %v328 = vlaneseq
        %v329 = vshrl.u32 %v328, 7
        %v330 = vsub.s32 0, %v329
        %v331 = vrot.slane %v326, %v330
        %v332 = vlaneseq
        %v333 = vshrl.u32 %v332, 7
        %v334 = vsub.s32 1, %v333
        %v335 = vrot.slane %v326, %v334
        %v338 = vmul.f32 %v324, %v331
        %v339 = vmul.f32 %v323, %v335
        %v342 = vrot.slane %v338, 6
        %v343 = vrot.slane %v339, 6
        %346 = vst [vmem:[#allocation2] sm:$0xc] %v342
        %347 = vst [vmem:[#allocation2 + $0x8] sm:$0xc] %v343
        %348 = vrot.lane.b32.xlu0 %v289, 15
        %v349 = vpop.permute.xlu0 %348
        %350 = vrot.lane.b32.xlu0 %v290, 15
        %v351 = vpop.permute.xlu0 %350
        %vm352 = vcmp.lt.s32.totalorder %v298, 15
        %v353 = vsel %vm352, %v349, %v351
        %v354 = vsel %vm352, %v351, %v349
        %s355 = scalar_lea.vmem [#allocation6], 2
        %v356 = vld [vmem:[%s355] ss:$8 sm:$0x3]
        %v358 = vlaneseq
        %v359 = vshrl.u32 %v358, 7
        %v360 = vsub.s32 0, %v359
        %v361 = vrot.slane %v356, %v360
        %v362 = vlaneseq
        %v363 = vshrl.u32 %v362, 7
        %v364 = vsub.s32 1, %v363
        %v365 = vrot.slane %v356, %v364
        %v368 = vmul.f32 %v354, %v361
        %v369 = vmul.f32 %v353, %v365
        %v372 = vrot.slane %v368, 4
        %v373 = vrot.slane %v369, 4
        %376 = vst [vmem:[#allocation2] sm:$0x30] %v372
        %377 = vst [vmem:[#allocation2 + $0x8] sm:$0x30] %v373
        %378 = vrot.lane.b32.xlu0 %v289, 1
        %v379 = vpop.permute.xlu0 %378
        %380 = vrot.lane.b32.xlu0 %v290, 1
        %v381 = vpop.permute.xlu0 %380
        %vm382 = vcmp.lt.s32.totalorder %v298, 1
        %v383 = vsel %vm382, %v379, %v381
        %v384 = vsel %vm382, %v381, %v379
        %s385 = scalar_lea.vmem [#allocation6], 3
        %v386 = vld [vmem:[%s385] ss:$8 sm:$0x3]
        %v388 = vlaneseq
        %v389 = vshrl.u32 %v388, 7
        %v390 = vsub.s32 0, %v389
        %v391 = vrot.slane %v386, %v390
        %v392 = vlaneseq
        %v393 = vshrl.u32 %v392, 7
        %v394 = vsub.s32 1, %v393
        %v395 = vrot.slane %v386, %v394
        %v398 = vmul.f32 %v384, %v391
        %v399 = vmul.f32 %v383, %v395
        %v402 = vrot.slane %v398, 2
        %v403 = vrot.slane %v399, 2
        %406 = vst [vmem:[#allocation2] sm:$0xc0] %v402
        %407 = vst [vmem:[#allocation2 + $0x8] sm:$0xc0] %v403
        %408 = vst [vmem:[#allocation2 + $0x10] sm:$0x3] %v289
        %409 = vst [vmem:[#allocation2 + $0x18] sm:$0x3] %v290
        %410 = vrot.lane.b32.xlu0 %v289, 127
        %v411 = vpop.permute.xlu0 %410
        %412 = vrot.lane.b32.xlu0 %v290, 127
        %v413 = vpop.permute.xlu0 %412
        %vm414 = vcmp.lt.s32.totalorder %v298, 127
        %v415 = vsel %vm414, %v411, %v413
        %v416 = vsel %vm414, %v413, %v411
        %s417 = scalar_lea.vmem [#allocation6], 5
        %v418 = vld [vmem:[%s417] ss:$8 sm:$0x3]
        %v420 = vlaneseq
        %v421 = vshrl.u32 %v420, 7
        %v422 = vsub.s32 0, %v421
        %v423 = vrot.slane %v418, %v422
        %v424 = vlaneseq
        %v425 = vshrl.u32 %v424, 7
        %v426 = vsub.s32 1, %v425
        %v427 = vrot.slane %v418, %v426
        %v430 = vmul.f32 %v415, %v423
        %v431 = vmul.f32 %v416, %v427
        %v434 = vrot.slane %v430, 6
        %v435 = vrot.slane %v431, 6
        %438 = vst [vmem:[#allocation2 + $0x10] sm:$0xc] %v434
        %439 = vst [vmem:[#allocation2 + $0x18] sm:$0xc] %v435
        %440 = vrot.lane.b32.xlu0 %v289, 113
        %v441 = vpop.permute.xlu0 %440
        %442 = vrot.lane.b32.xlu0 %v290, 113
        %v443 = vpop.permute.xlu0 %442
        %vm444 = vcmp.lt.s32.totalorder %v298, 113
        %v445 = vsel %vm444, %v441, %v443
        %v446 = vsel %vm444, %v443, %v441
        %s447 = scalar_lea.vmem [#allocation6], 6
        %v448 = vld [vmem:[%s447] ss:$8 sm:$0x3]
        %v450 = vlaneseq
        %v451 = vshrl.u32 %v450, 7
        %v452 = vsub.s32 0, %v451
        %v453 = vrot.slane %v448, %v452
        %v454 = vlaneseq
        %v455 = vshrl.u32 %v454, 7
        %v456 = vsub.s32 1, %v455
        %v457 = vrot.slane %v448, %v456
        %v460 = vmul.f32 %v445, %v453
        %v461 = vmul.f32 %v446, %v457
        %v464 = vrot.slane %v460, 4
        %v465 = vrot.slane %v461, 4
        %468 = vst [vmem:[#allocation2 + $0x10] sm:$0x30] %v464
        %469 = vst [vmem:[#allocation2 + $0x18] sm:$0x30] %v465
        %470 = vrot.lane.b32.xlu0 %v289, 112
        %v471 = vpop.permute.xlu0 %470
        %472 = vrot.lane.b32.xlu0 %v290, 112
        %v473 = vpop.permute.xlu0 %472
        %vm474 = vcmp.lt.s32.totalorder %v298, 112
        %v475 = vsel %vm474, %v471, %v473
        %v476 = vsel %vm474, %v473, %v471
        %s477 = scalar_lea.vmem [#allocation6], 7
        %v478 = vld [vmem:[%s477] ss:$8 sm:$0x3]
        %v480 = vlaneseq
        %v481 = vshrl.u32 %v480, 7
        %v482 = vsub.s32 0, %v481
        %v483 = vrot.slane %v478, %v482
        %v484 = vlaneseq
        %v485 = vshrl.u32 %v484, 7
        %v486 = vsub.s32 1, %v485
        %v487 = vrot.slane %v478, %v486
        %v490 = vmul.f32 %v475, %v483
        %v491 = vmul.f32 %v476, %v487
        %v494 = vrot.slane %v490, 2
        %v495 = vrot.slane %v491, 2
        %498 = vst [vmem:[#allocation2 + $0x10] sm:$0xc0] %v494
        %499 = vst [vmem:[#allocation2 + $0x18] sm:$0xc0] %v495
        %500 = vrot.lane.b32.xlu0 %v289, 111
        %v501 = vpop.permute.xlu0 %500
        %502 = vrot.lane.b32.xlu0 %v290, 111
        %v503 = vpop.permute.xlu0 %502
        %vm504 = vcmp.lt.s32.totalorder %v298, 111
        %v505 = vsel %vm504, %v501, %v503
        %v506 = vsel %vm504, %v503, %v501
        %s507 = scalar_lea.vmem [#allocation6], 16
        %v508 = vld [vmem:[%s507] ss:$8 sm:$0x3]
        %v510 = vlaneseq
        %v511 = vshrl.u32 %v510, 7
        %v512 = vsub.s32 0, %v511
        %v513 = vrot.slane %v508, %v512
        %v514 = vlaneseq
        %v515 = vshrl.u32 %v514, 7
        %v516 = vsub.s32 1, %v515
        %v517 = vrot.slane %v508, %v516
        %v520 = vmul.f32 %v505, %v513
        %v521 = vmul.f32 %v506, %v517
        %522 = vst [vmem:[#allocation2 + $0x20] sm:$0x3] %v520
        %523 = vst [vmem:[#allocation2 + $0x28] sm:$0x3] %v521
        %v524 = vld [vmem:[%s276] sm:$0xf]
        %v525 = vld [vmem:[#allocation2] sm:$0xff]
        %v526 = vld [vmem:[#allocation2 + $0x8] sm:$0xff]
        %v527 = vld [vmem:[#allocation2 + $0x10] sm:$0xff]
        %v528 = vld [vmem:[#allocation2 + $0x18] sm:$0xff]
        %v529 = vld [vmem:[#allocation2 + $0x20] sm:$0x3]
        %v530 = vld [vmem:[#allocation2 + $0x28] sm:$0x3]
        %v531 = vld [vmem:[%s280] sm:$0xf]
        %533 = vset.pattern.permute.xlu0 0
        %534 = vperm.xlu0 %533, %v531
        %v535 = vpop.permute.xlu0 %534
        %vm537 = vcmask 146432
        %v539 = vsel %vm537, %v524, 0
        %vm541 = vcmask 1041408
        %v543 = vsel %vm541, %v529, 0
        %v546 = vsel %vm541, %v530, 0
        %548 = vmatprep.subr.mxu0 0.0
        %549 = vmatpush1.msra.mxu0 0.0
        %550 = vmatprep.subr.mxu0 0.0
        %551 = vmatpush1.msra.mxu0 0.0
        %552 = vmatprep.subr.mxu0 0.0
        %553 = vmatpush1.msra.mxu0 0.0
        %554 = vmatprep.subr.mxu0 0.0
        %555 = vmatpush1.msra.mxu0 0.0
        %556 = vmatprep.subr.mxu0 0.0
        %557 = vmatpush1.msra.mxu0 0.0
        %558 = vmatprep.subr.mxu0 0.0
        %559 = vmatpush1.msra.mxu0 0.0
        %560 = vmatprep.subr.mxu0 0.0
        %561 = vmatpush1.msra.mxu0 0.0
        %562 = vmatprep.subr.mxu0 0.0
        %563 = vmatpush1.msra.mxu0 0.0
        %564 = vmatprep.subr.mxu0 0.0
        %565 = vmatpush1.msra.mxu0 0.0
        %566 = vmatprep.subr.mxu0 0.0
        %567 = vmatpush1.msra.mxu0 0.0
        %568 = vmatprep.subr.mxu0 0.0
        %569 = vmatpush1.msra.mxu0 0.0
        %570 = vmatprep.subr.mxu0 0.0
        %571 = vmatpush1.msra.mxu0 0.0
        %572 = vmatprep.subr.mxu0 0.0
        %573 = vmatpush1.msra.mxu0 0.0
        %574 = vmatprep.subr.mxu0 %v546
        %575 = vmatpush1.msra.mxu0 %v543
        %576 = vmatprep.subr.mxu0 %v528
        %577 = vmatpush1.msra.mxu0 %v527
        %578 = vmatprep.subr.mxu0 %v526
        %579 = vmatpush1.msra.mxu0 %v525
        %580 = vmatprep.subr.mxu0 0.0
        %581 = vmatpush2.msra.mxu0 0.0
        %582 = vmatprep.subr.mxu0 0.0
        %583 = vmatpush2.msra.mxu0 0.0
        %584 = vmatprep.subr.mxu0 0.0
        %585 = vmatpush2.msra.mxu0 0.0
        %586 = vmatprep.subr.mxu0 0.0
        %587 = vmatpush2.msra.mxu0 0.0
        %588 = vmatprep.subr.mxu0 0.0
        %589 = vmatpush2.msra.mxu0 0.0
        %590 = vmatprep.subr.mxu0 0.0
        %591 = vmatpush2.msra.mxu0 0.0
        %592 = vmatprep.subr.mxu0 0.0
        %593 = vmatpush2.msra.mxu0 0.0
        %594 = vmatprep.subr.mxu0 0.0
        %595 = vmatpush2.msra.mxu0 0.0
        %596 = vmatprep.subr.mxu0 0.0
        %597 = vmatpush2.msra.mxu0 0.0
        %598 = vmatprep.subr.mxu0 0.0
        %599 = vmatpush2.msra.mxu0 0.0
        %600 = vmatprep.subr.mxu0 0.0
        %601 = vmatpush2.msra.mxu0 0.0
        %602 = vmatprep.subr.mxu0 0.0
        %603 = vmatpush2.msra.mxu0 0.0
        %604 = vmatprep.subr.mxu0 0.0
        %605 = vmatpush2.msra.mxu0 0.0
        %606 = vmatprep.subr.mxu0 0.0
        %607 = vmatpush2.msra.mxu0 0.0
        %608 = vmatprep.subr.mxu0 0.0
        %609 = vmatpush2.msra.mxu0 0.0
        %610 = vmatprep.subr.mxu0 0.0
        %611 = vmatpush2.msra.mxu0 0.0
        %612 = vmatprep.mubr.f32.mxu0 0.0
        %613 = vmatmul.mubr.f32.gmra.mxu0 %v539
        %v614 = vpop.f32.mrf.mxu0
        %v615 = vadd.f32 %v535, %v614
        %v616 = vpop.f32.mrf.mxu0
        %v617 = vadd.f32 %v535, %v616
        %618 = vdwg.mxu0
        %v619 = vmax.f32 %v615, 0.0
        %v620 = vmax.f32 %v617, 0.0
        %v623 = vcombine.low %v619, %v620
        %625 = vst [vmem:[%s272] sm:$0xff] %v623
        %s626 = sand.u32 %s145, 1
        %s627 = scalar_lea.sflag [#allocation5], %s626
        %s628 = sand.u32 %s145, 1
        %s629 = smul.addr %s628, 8
        %s630 = scalar_lea.vmem [#allocation8], %s629
        // Predicated region
        $region45: #{tpu_custom_call.1} parent=35 // pred_check
          %p631 = pneg %p155
        $region46: #{tpu_custom_call.1} parent=35 // pred_check_branch
          %633 = sbr.rel (%p631) target = $region48
        $region47: #{tpu_custom_call.1} parent=35 // pred_region
          %s635 = ssub.s32 128, 128
          %636 = vsyncadd %s627, %s635
          %s637 = smul.addr %s27, 2
          %s638 = smul.addr %s26, 4
          %s639 = sadd.s32 %s637, %s638
          %s640 = smul.addr %s639, 64
          %s641 = scalar_lea.hbm %s4, %s640
          %s643 = sshll.u32 %s630, 4
          %s644 = int_to_ptr.vmem [resolvable:$true] %s643
          %646 = dma.vmem_to_hbm [thread:$0]  %s644, 128, %s641, %s627
        $region48: #{tpu_custom_call.1} parent=35 // pred_fallthru
          _
      $region36: #{tpu_custom_call.1} parent=5 // pred_fallthru
        _
      %p647 = scmp.le.s32.totalorder 2, %s17
      // Predicated region
      $region49: #{tpu_custom_call.1} parent=5 // pred_check
        %p648 = pneg %p647
      $region50: #{tpu_custom_call.1} parent=5 // pred_check_branch
        %650 = sbr.rel (%p648) target = $region52
      $region51: #{tpu_custom_call.1} parent=5 // pred_region
        %s651 = ssub.s32 %s17, 2
        // Predicated region
        $region53: #{tpu_custom_call.1} parent=51 // pred_check
          %p652 = pneg %p161
        $region54: #{tpu_custom_call.1} parent=51 // pred_check_branch
          %654 = sbr.rel (%p652) target = $region56
        $region55: #{tpu_custom_call.1} parent=51 // pred_region
          %s655 = sand.u32 %s146, 1
          %s656 = scalar_lea.sflag [#allocation5], %s655
          %s657 = sand.u32 %s146, 1
          %s658 = smul.addr %s657, 8
          %s659 = scalar_lea.vmem [#allocation8], %s658
          %660 = dma.done %s656, 128
        $region56: #{tpu_custom_call.1} parent=51 // pred_fallthru
          _
      $region52: #{tpu_custom_call.1} parent=5 // pred_fallthru
        _
    $region6: #{tpu_custom_call.1} parent=1 // loop_footer
      %s21 = sadd.s32 1, %s17
    $region7: #{tpu_custom_call.1} parent=1 // loop_footer_branch
      %16 = sbr.rel target = $region3
    $region8: #{tpu_custom_call.1} parent=1 // loop_exit
      _
    %661 = vsyncpa [#allocation4], 1
    %s662 = scalar_lea.sflag [#allocation4], 1
    %663 = vsyncpa %s662, 1
    %664 = vsyncpa [#allocation7], 1
    %665 = vsyncpa [#allocation5], 1
    %s666 = scalar_lea.sflag [#allocation5], 1
    %667 = vsyncpa %s666, 1

</llo_original>
